<compile_context>
chip_gen: v7x
topology: tpu7x:2x2x1
jax: 0.10.0
libtpu: 0.0.40
codegen_flags: <defaults>
</compile_context>

<pallas_src>
import functools

import numpy as np
import jax
import jax.numpy as jnp
from jax.experimental import pallas as pl
from jax.experimental.pallas import tpu as pltpu

BN_EPS = 1e-5
LEAKY_SLOPE = 0.1
_VMEM_LIMIT = 48 * 1024 * 1024          # scoped VMEM cap (safe on 64 MiB v7x and 128 MiB v5e/v6e)
_TILE_STREAM_BUDGET = 24 * 1024 * 1024  # bytes of double-buffered DMA streams per grid step


def _round_up(x, m):
    return (x + m - 1) // m * m


def _pick_tile_m(m, k, cout_pad, in_itemsize):
    """Rows per grid step, sized so the double-buffered streams fit the VMEM budget."""
    bytes_per_row = 2 * (4 * k * in_itemsize + cout_pad * 4)  # 4 patch streams in + pooled out
    tm = _TILE_STREAM_BUDGET // max(bytes_per_row, 1)
    tm = max(8, min(1024, (tm // 8) * 8))
    tm = min(tm, _round_up(m, 8))
    return int(tm)


# ---------------- Pass 1: conv (4 matmuls) + 2x2 max-pool + partial BN stats -----------------
def _conv_pool_kernel(p00_ref, p01_ref, p10_ref, p11_ref, w_ref, b_ref,
                      pooled_ref, psum_ref, psq_ref, *, m_total, tile_m):
    w = w_ref[...]
    # Conv2d(3x3) as im2col matmuls on the MXU; MaxPool2d(2) as a running max over the
    # four pool-window positions.  Bias is per-channel, so it is hoisted out of the max.
    acc = jnp.dot(p00_ref[...], w, preferred_element_type=jnp.float32)
    acc = jnp.maximum(acc, jnp.dot(p01_ref[...], w, preferred_element_type=jnp.float32))
    acc = jnp.maximum(acc, jnp.dot(p10_ref[...], w, preferred_element_type=jnp.float32))
    acc = jnp.maximum(acc, jnp.dot(p11_ref[...], w, preferred_element_type=jnp.float32))
    pooled = acc + b_ref[...]
    pooled_ref[...] = pooled

    # Per-tile partial sums for the full-batch BatchNorm statistics.
    # Rows past m_total are padding and must not contribute.
    if m_total % tile_m == 0:
        valid = pooled
    else:
        row = (jax.lax.broadcasted_iota(jnp.int32, pooled.shape, 0)
               + pl.program_id(0) * tile_m)
        valid = jnp.where(row < m_total, pooled, 0.0)
    psum_ref[0] = jnp.sum(valid, axis=0, keepdims=True)
    psq_ref[0] = jnp.sum(valid * valid, axis=0, keepdims=True)


# ---------------- Pass 2: BatchNorm (folded scale/shift) + LeakyReLU -----------------
def _bn_act_kernel(pooled_ref, scale_ref, shift_ref, o_ref):
    y = pooled_ref[...] * scale_ref[...] + shift_ref[...]
    o_ref[...] = jnp.where(y >= 0, y, LEAKY_SLOPE * y)


def down_forward(x, conv_w, conv_b, bn_gamma, bn_beta, *, compute_dtype=jnp.float32):
    """x: (N, Cin, H, W) float32 (NCHW, like PyTorch). Returns (N, Cout, H//2, W//2)."""
    N, Cin, H, W = x.shape
    Cout = conv_w.shape[0]
    assert H % 2 == 0 and W % 2 == 0
    Hh, Wh = H // 2, W // 2
    M = N * Hh * Wh
    K = 9 * Cin
    Cout_pad = _round_up(Cout, 128)
    in_itemsize = jnp.dtype(compute_dtype).itemsize
    TM = _pick_tile_m(M, K, Cout_pad, in_itemsize)
    M_pad = _round_up(M, TM)
    num_tiles = M_pad // TM

    # ---- glue: layout / im2col (plain JAX), built directly at half resolution ----
    x_nhwc = jnp.transpose(x, (0, 2, 3, 1))                               # (N,H,W,Cin)
    xp = jnp.pad(x_nhwc, ((0, 0), (1, 1), (1, 1), (0, 0)))                # (N,H+2,W+2,Cin)
    patch_mats = []
    for a in range(2):
        for b in range(2):
            taps = [xp[:, a + dy: a + dy + H: 2, b + dx: b + dx + W: 2, :]
                    for dy in range(3) for dx in range(3)]
            pm = jnp.concatenate(taps, axis=-1).reshape(M, K)             # (M, 9*Cin)
            pm = jnp.pad(pm, ((0, M_pad - M), (0, 0))).astype(compute_dtype)
            patch_mats.append(pm)

    # conv weight (Cout,Cin,3,3) -> (kh,kw,cin,cout) -> (9*Cin, Cout_pad) zero-padded lanes
    w_mat = jnp.transpose(conv_w, (2, 3, 1, 0)).reshape(K, Cout)
    w_mat = jnp.pad(w_mat, ((0, 0), (0, Cout_pad - Cout))).astype(compute_dtype)
    b_row = jnp.pad(conv_b.astype(jnp.float32), (0, Cout_pad - Cout)).reshape(1, Cout_pad)

    row_spec_in = pl.BlockSpec((TM, K), lambda i: (i, 0))
    row_spec_out = pl.BlockSpec((TM, Cout_pad), lambda i: (i, 0))
    full_w_spec = pl.BlockSpec((K, Cout_pad), lambda i: (0, 0))
    full_row_spec = pl.BlockSpec((1, Cout_pad), lambda i: (0, 0))
    stat_spec = pl.BlockSpec((1, 1, Cout_pad), lambda i: (i, 0, 0))

    cost1 = pl.CostEstimate(
        flops=int(2 * 4 * M_pad * K * Cout_pad + 6 * M_pad * Cout_pad),
        transcendentals=0,
        bytes_accessed=int(4 * M_pad * K * in_itemsize + K * Cout_pad * in_itemsize
                           + Cout_pad * 4 + M_pad * Cout_pad * 4
                           + 2 * num_tiles * Cout_pad * 4),
    )

    pooled, psum, psq = pl.pallas_call(
        functools.partial(_conv_pool_kernel, m_total=M, tile_m=TM),
        grid=(num_tiles,),
        in_specs=[row_spec_in, row_spec_in, row_spec_in, row_spec_in,
                  full_w_spec, full_row_spec],
        out_specs=[row_spec_out, stat_spec, stat_spec],
        out_shape=[
            jax.ShapeDtypeStruct((M_pad, Cout_pad), jnp.float32),
            jax.ShapeDtypeStruct((num_tiles, 1, Cout_pad), jnp.float32),
            jax.ShapeDtypeStruct((num_tiles, 1, Cout_pad), jnp.float32),
        ],
        compiler_params=pltpu.CompilerParams(
            dimension_semantics=("parallel",), vmem_limit_bytes=_VMEM_LIMIT),
        cost_estimate=cost1,
    )(*patch_mats, w_mat, b_row)

    # ---- tiny glue: combine per-tile stats into folded BN scale/shift (training mode) ----
    mean = jnp.sum(psum, axis=(0, 1)) / M                                  # (Cout_pad,)
    var = jnp.maximum(jnp.sum(psq, axis=(0, 1)) / M - mean * mean, 0.0)
    inv_std = jax.lax.rsqrt(var + BN_EPS)
    gamma_pad = jnp.pad(bn_gamma.astype(jnp.float32), (0, Cout_pad - Cout),
                        constant_values=1.0)
    beta_pad = jnp.pad(bn_beta.astype(jnp.float32), (0, Cout_pad - Cout))
    scale = (gamma_pad * inv_std).reshape(1, Cout_pad)
    shift = (beta_pad - mean * gamma_pad * inv_std).reshape(1, Cout_pad)

    cost2 = pl.CostEstimate(
        flops=int(3 * M_pad * Cout_pad), transcendentals=0,
        bytes_accessed=int(2 * M_pad * Cout_pad * 4 + 2 * Cout_pad * 4))

    y = pl.pallas_call(
        _bn_act_kernel,
        grid=(num_tiles,),
        in_specs=[row_spec_out, full_row_spec, full_row_spec],
        out_specs=row_spec_out,
        out_shape=jax.ShapeDtypeStruct((M_pad, Cout_pad), jnp.float32),
        compiler_params=pltpu.CompilerParams(
            dimension_semantics=("parallel",), vmem_limit_bytes=_VMEM_LIMIT),
        cost_estimate=cost2,
    )(pooled, scale, shift)

    # rows are (n, h/2, w/2) row-major with channels last -> slice padding, back to NCHW
    y = y[:M, :Cout].reshape(N, Hh, Wh, Cout)
    return jnp.transpose(y, (0, 3, 1, 2))


def down_reference(x, conv_w, conv_b, bn_gamma, bn_beta):
    """Pure-JAX reference matching PyTorch semantics (BN in training mode)."""
    conv = jax.lax.conv_general_dilated(
        x, conv_w, window_strides=(1, 1), padding=((1, 1), (1, 1)),
        dimension_numbers=('NCHW', 'OIHW', 'NCHW')) + conv_b[None, :, None, None]
    pooled = jax.lax.reduce_window(conv, -jnp.inf, jax.lax.max,
                                   (1, 1, 2, 2), (1, 1, 2, 2), 'VALID')
    mean = pooled.mean(axis=(0, 2, 3), keepdims=True)
    var = ((pooled - mean) ** 2).mean(axis=(0, 2, 3), keepdims=True)
    y = (pooled - mean) * jax.lax.rsqrt(var + BN_EPS)
    y = y * bn_gamma[None, :, None, None] + bn_beta[None, :, None, None]
    return jnp.where(y >= 0, y, LEAKY_SLOPE * y)


if __name__ == "__main__":
    key = jax.random.PRNGKey(0)
    k_x, k_w, k_b = jax.random.split(key, 3)

    N, Cin, Cout, H, W = 2, 4, 8, 16, 16

    x = jax.random.normal(k_x, (N, Cin, H, W), dtype=jnp.float32)
    # deterministic synthetic parameters (shapes from Conv2d(n_in, n_out, 3) / BatchNorm2d(n_out))
    conv_w = 0.1 * jax.random.normal(k_w, (Cout, Cin, 3, 3), dtype=jnp.float32)
    conv_b = 0.05 * jax.random.normal(k_b, (Cout,), dtype=jnp.float32)
    bn_gamma = jnp.ones((Cout,), dtype=jnp.float32)   # PyTorch BatchNorm default init
    bn_beta = jnp.zeros((Cout,), dtype=jnp.float32)

    ref = jax.block_until_ready(down_reference(x, conv_w, conv_b, bn_gamma, bn_beta))

    # f32 path (v5e-safe, tight tolerance)
    out = jax.block_until_ready(down_forward(x, conv_w, conv_b, bn_gamma, bn_beta))
    assert out.shape == (N, Cout, H // 2, W // 2), out.shape
    np.testing.assert_allclose(np.asarray(out), np.asarray(ref), rtol=1e-4, atol=1e-4)

    # bf16-input fast path (v6e/v7x MXU + halved HBM traffic); accumulation stays f32.
    out_bf16 = jax.block_until_ready(
        down_forward(x, conv_w, conv_b, bn_gamma, bn_beta, compute_dtype=jnp.bfloat16))
    np.testing.assert_allclose(np.asarray(out_bf16), np.asarray(ref), rtol=5e-2, atol=5e-2)

    print("KERNEL_OK")
</pallas_src>

<mosaic_0001>
module attributes {stable_mosaic.version = 11 : i64} {
  func.func @_conv_pool_kernel(%arg0: i32, %arg1: memref<128x36xf32, #tpu.memory_space<vmem>>, %arg2: memref<128x36xf32, #tpu.memory_space<vmem>>, %arg3: memref<128x36xf32, #tpu.memory_space<vmem>>, %arg4: memref<128x36xf32, #tpu.memory_space<vmem>>, %arg5: memref<36x128xf32, #tpu.memory_space<vmem>>, %arg6: memref<1x128xf32, #tpu.memory_space<vmem>>, %arg7: memref<128x128xf32, #tpu.memory_space<vmem>>, %arg8: memref<1x1x128xf32, #tpu.memory_space<vmem>>, %arg9: memref<1x1x128xf32, #tpu.memory_space<vmem>>) attributes {dimension_semantics = [#tpu.dimension_semantics<parallel>], iteration_bounds = array<i64: 1>, scalar_prefetch = 0 : i64, scratch_operands = 0 : i64, tpu.core_type = #tpu.core_type<tc>, window_params = [{transform_indices = @transform_0, window_bounds = array<i64: 128, 36>}, {transform_indices = @transform_1, window_bounds = array<i64: 128, 36>}, {transform_indices = @transform_2, window_bounds = array<i64: 128, 36>}, {transform_indices = @transform_3, window_bounds = array<i64: 128, 36>}, {pipeline_mode = #tpu.pipeline_mode<synchronous>, transform_indices = @transform_4, window_bounds = array<i64: 36, 128>}, {pipeline_mode = #tpu.pipeline_mode<synchronous>, transform_indices = @transform_5, window_bounds = array<i64: 1, 128>}, {transform_indices = @transform_6, window_bounds = array<i64: 128, 128>}, {transform_indices = @transform_7, window_bounds = array<i64: 1, 1, 128>}, {transform_indices = @transform_8, window_bounds = array<i64: 1, 1, 128>}]} {
    %c0 = arith.constant 0 : index
    %c0_0 = arith.constant 0 : index
    %0 = vector.load %arg5[%c0, %c0_0] : memref<36x128xf32, #tpu.memory_space<vmem>>, vector<36x128xf32>
    %c0_1 = arith.constant 0 : index
    %c0_2 = arith.constant 0 : index
    %1 = vector.load %arg1[%c0_1, %c0_2] : memref<128x36xf32, #tpu.memory_space<vmem>>, vector<128x36xf32>
    %cst = arith.constant dense<0.000000e+00> : vector<128x128xf32>
    %2 = tpu.matmul %1, %0, %cst {dimension_numbers = #tpu.dot_dimension_numbers<[1], [0], [0], [1], [0, 0, 1, 1], [], []>} : vector<128x36xf32>, vector<36x128xf32>, vector<128x128xf32> -> vector<128x128xf32>
    %c0_3 = arith.constant 0 : index
    %c0_4 = arith.constant 0 : index
    %3 = vector.load %arg2[%c0_3, %c0_4] : memref<128x36xf32, #tpu.memory_space<vmem>>, vector<128x36xf32>
    %cst_5 = arith.constant dense<0.000000e+00> : vector<128x128xf32>
    %4 = tpu.matmul %3, %0, %cst_5 {dimension_numbers = #tpu.dot_dimension_numbers<[1], [0], [0], [1], [0, 0, 1, 1], [], []>} : vector<128x36xf32>, vector<36x128xf32>, vector<128x128xf32> -> vector<128x128xf32>
    %5 = arith.maximumf %2, %4 : vector<128x128xf32>
    %c0_6 = arith.constant 0 : index
    %c0_7 = arith.constant 0 : index
    %6 = vector.load %arg3[%c0_6, %c0_7] : memref<128x36xf32, #tpu.memory_space<vmem>>, vector<128x36xf32>
    %cst_8 = arith.constant dense<0.000000e+00> : vector<128x128xf32>
    %7 = tpu.matmul %6, %0, %cst_8 {dimension_numbers = #tpu.dot_dimension_numbers<[1], [0], [0], [1], [0, 0, 1, 1], [], []>} : vector<128x36xf32>, vector<36x128xf32>, vector<128x128xf32> -> vector<128x128xf32>
    %8 = arith.maximumf %5, %7 : vector<128x128xf32>
    %c0_9 = arith.constant 0 : index
    %c0_10 = arith.constant 0 : index
    %9 = vector.load %arg4[%c0_9, %c0_10] : memref<128x36xf32, #tpu.memory_space<vmem>>, vector<128x36xf32>
    %cst_11 = arith.constant dense<0.000000e+00> : vector<128x128xf32>
    %10 = tpu.matmul %9, %0, %cst_11 {dimension_numbers = #tpu.dot_dimension_numbers<[1], [0], [0], [1], [0, 0, 1, 1], [], []>} : vector<128x36xf32>, vector<36x128xf32>, vector<128x128xf32> -> vector<128x128xf32>
    %11 = arith.maximumf %8, %10 : vector<128x128xf32>
    %c0_12 = arith.constant 0 : index
    %c0_13 = arith.constant 0 : index
    %12 = vector.load %arg6[%c0_12, %c0_13] : memref<1x128xf32, #tpu.memory_space<vmem>>, vector<1x128xf32>
    %13 = vector.broadcast %12 : vector<1x128xf32> to vector<128x128xf32>
    %14 = arith.addf %11, %13 : vector<128x128xf32>
    %c0_14 = arith.constant 0 : index
    %c0_15 = arith.constant 0 : index
    %15 = vector.load %arg7[%c0_14, %c0_15] : memref<128x128xf32, #tpu.memory_space<vmem>>, vector<128x128xf32>
    tpu.vector_store %arg7[%c0_14, %c0_15], %14 {strides = array<i32>} : memref<128x128xf32, #tpu.memory_space<vmem>>, vector<128x128xf32>,
    %cst_16 = arith.constant dense<0.000000e+00> : vector<128xf32>
    %16 = vector.multi_reduction <add>, %14, %cst_16 [0] : vector<128x128xf32> to vector<128xf32>
    %17 = vector.shape_cast %16 : vector<128xf32> to vector<1x128xf32>
    %c0_17 = arith.constant 0 : index
    %c0_18 = arith.constant 0 : index
    %c0_19 = arith.constant 0 : index
    %18 = vector.load %arg8[%c0_17, %c0_18, %c0_19] : memref<1x1x128xf32, #tpu.memory_space<vmem>>, vector<1x1x128xf32>
    %19 = vector.shape_cast %18 : vector<1x1x128xf32> to vector<1x128xf32>
    %20 = vector.shape_cast %17 : vector<1x128xf32> to vector<1x1x128xf32>
    tpu.vector_store %arg8[%c0_17, %c0_18, %c0_19], %20 {strides = array<i32>} : memref<1x1x128xf32, #tpu.memory_space<vmem>>, vector<1x1x128xf32>,
    %21 = arith.mulf %14, %14 : vector<128x128xf32>
    %cst_20 = arith.constant dense<0.000000e+00> : vector<128xf32>
    %22 = vector.multi_reduction <add>, %21, %cst_20 [0] : vector<128x128xf32> to vector<128xf32>
    %23 = vector.shape_cast %22 : vector<128xf32> to vector<1x128xf32>
    %c0_21 = arith.constant 0 : index
    %c0_22 = arith.constant 0 : index
    %c0_23 = arith.constant 0 : index
    %24 = vector.load %arg9[%c0_21, %c0_22, %c0_23] : memref<1x1x128xf32, #tpu.memory_space<vmem>>, vector<1x1x128xf32>
    %25 = vector.shape_cast %24 : vector<1x1x128xf32> to vector<1x128xf32>
    %26 = vector.shape_cast %23 : vector<1x128xf32> to vector<1x1x128xf32>
    tpu.vector_store %arg9[%c0_21, %c0_22, %c0_23], %26 {strides = array<i32>} : memref<1x1x128xf32, #tpu.memory_space<vmem>>, vector<1x1x128xf32>,
    return
  }
  func.func @transform_0(%arg0: i32) -> (i32, i32) {
    %c0_i32 = arith.constant 0 : i32
    %c0_i32_0 = arith.constant 0 : i32
    return %arg0, %c0_i32 : i32, i32
  }
  func.func @transform_1(%arg0: i32) -> (i32, i32) {
    %c0_i32 = arith.constant 0 : i32
    %c0_i32_0 = arith.constant 0 : i32
    return %arg0, %c0_i32 : i32, i32
  }
  func.func @transform_2(%arg0: i32) -> (i32, i32) {
    %c0_i32 = arith.constant 0 : i32
    %c0_i32_0 = arith.constant 0 : i32
    return %arg0, %c0_i32 : i32, i32
  }
  func.func @transform_3(%arg0: i32) -> (i32, i32) {
    %c0_i32 = arith.constant 0 : i32
    %c0_i32_0 = arith.constant 0 : i32
    return %arg0, %c0_i32 : i32, i32
  }
  func.func @transform_4(%arg0: i32) -> (i32, i32) {
    %c0_i32 = arith.constant 0 : i32
    %c0_i32_0 = arith.constant 0 : i32
    %c0_i32_1 = arith.constant 0 : i32
    return %c0_i32, %c0_i32_0 : i32, i32
  }
  func.func @transform_5(%arg0: i32) -> (i32, i32) {
    %c0_i32 = arith.constant 0 : i32
    %c0_i32_0 = arith.constant 0 : i32
    %c0_i32_1 = arith.constant 0 : i32
    return %c0_i32, %c0_i32_0 : i32, i32
  }
  func.func @transform_6(%arg0: i32) -> (i32, i32) {
    %c0_i32 = arith.constant 0 : i32
    %c0_i32_0 = arith.constant 0 : i32
    return %arg0, %c0_i32 : i32, i32
  }
  func.func @transform_7(%arg0: i32) -> (i32, i32, i32) {
    %c0_i32 = arith.constant 0 : i32
    %c0_i32_0 = arith.constant 0 : i32
    %c0_i32_1 = arith.constant 0 : i32
    return %arg0, %c0_i32, %c0_i32_0 : i32, i32, i32
  }
  func.func @transform_8(%arg0: i32) -> (i32, i32, i32) {
    %c0_i32 = arith.constant 0 : i32
    %c0_i32_0 = arith.constant 0 : i32
    %c0_i32_1 = arith.constant 0 : i32
    return %arg0, %c0_i32, %c0_i32_0 : i32, i32, i32
  }
}

</mosaic_0001>

<llo_original>
// kernel: tpu_custom_call.1
$region0: #{tpu_custom_call.1}
  #allocation0 [shape = 'u32[]', space=smem, size = 0x4, offset = 0x4, fixed_abs, tag = 'smem constant byte address 0x4 - core index']
  #allocation1 [shape = 'u32[144,128]{1,0:T(1,128)}', space=vmem, size = 0x12000, scoped, tag = 'internal scratch']
  %s0 = inlined_call_operand.vmem [shape: f32[128,36], index: 0, kind: input, shape index: {}]
  %s1 = inlined_call_operand.vmem [shape: f32[128,36], index: 1, kind: input, shape index: {}]
  %s2 = inlined_call_operand.vmem [shape: f32[128,36], index: 2, kind: input, shape index: {}]
  %s3 = inlined_call_operand.vmem [shape: f32[128,36], index: 3, kind: input, shape index: {}]
  %s4 = inlined_call_operand.vmem [shape: f32[36,128], index: 4, kind: input, shape index: {}]
  %s5 = inlined_call_operand.vmem [shape: f32[1,128], index: 5, kind: input, shape index: {}]
  %s6 = inlined_call_operand.hbm [shape: f32[128,128], index: 6, kind: output, shape index: {0}]
  %s7 = inlined_call_operand.hbm [shape: f32[1,1,128], index: 7, kind: output, shape index: {1}]
  %s8 = inlined_call_operand.hbm [shape: f32[1,1,128], index: 8, kind: output, shape index: {2}]
  %9 = xla_tuple %s6, %s7, %s8
  %s10 = sld [smem:[#allocation0]]
  $region50: #{tpu_custom_call.1} parent=0
    _
  %s12 = ssub.s32 1, %s10
  %s13 = scalar_select 0, %s12, %s10
  $region1: #{tpu_custom_call.1} parent=0
    #allocation2 [shape = 'u8[65536]{0}', space=vmem, size = 0x10000, scoped, tag = 'output window, operand 0, single buffered']
    #allocation3 [shape = 's32[1]{0}', space=sflag, size = 0x4, scoped, tag = 'scoped memory for tpu_custom_call.1']
    #allocation4 [shape = 'u8[512]{0}', space=vmem, size = 0x400, scoped, tag = 'output window, operand 1, single buffered']
    #allocation5 [shape = 's32[1]{0}', space=sflag, size = 0x4, scoped, tag = 'scoped memory for tpu_custom_call.1']
    #allocation6 [shape = 'u8[512]{0}', space=vmem, size = 0x400, scoped, tag = 'output window, operand 2, single buffered']
    %14 = vsyncpa [#allocation3], 0
    %15 = vsyncpa [#allocation5], 0
    // Predicated region
    $region2: #{tpu_custom_call.1} parent=1 // pred_check
      _
    $region3: #{tpu_custom_call.1} parent=1 // pred_check_branch
      %17 = sbr.rel (0) target = $region5
    $region4: #{tpu_custom_call.1} parent=1 // pred_region
      _
    $region5: #{tpu_custom_call.1} parent=1 // pred_fallthru
      _
    // Predicated region
    $region6: #{tpu_custom_call.1} parent=1 // pred_check
      _
    $region7: #{tpu_custom_call.1} parent=1 // pred_check_branch
      %19 = sbr.rel (0) target = $region9
    $region8: #{tpu_custom_call.1} parent=1 // pred_region
      _
    $region9: #{tpu_custom_call.1} parent=1 // pred_fallthru
      _
    // Predicated region
    $region10: #{tpu_custom_call.1} parent=1 // pred_check
      _
    $region11: #{tpu_custom_call.1} parent=1 // pred_check_branch
      %21 = sbr.rel (0) target = $region13
    $region12: #{tpu_custom_call.1} parent=1 // pred_region
      _
    $region13: #{tpu_custom_call.1} parent=1 // pred_fallthru
      _
    // Predicated region
    $region14: #{tpu_custom_call.1} parent=1 // pred_check
      _
    $region15: #{tpu_custom_call.1} parent=1 // pred_check_branch
      %23 = sbr.rel (0) target = $region17
    $region16: #{tpu_custom_call.1} parent=1 // pred_region
      _
    $region17: #{tpu_custom_call.1} parent=1 // pred_fallthru
      _
    // Predicated region
    $region18: #{tpu_custom_call.1} parent=1 // pred_check
      _
    $region19: #{tpu_custom_call.1} parent=1 // pred_check_branch
      %25 = sbr.rel (0) target = $region21
    $region20: #{tpu_custom_call.1} parent=1 // pred_region
      _
    $region21: #{tpu_custom_call.1} parent=1 // pred_fallthru
      _
    // Predicated region
    $region22: #{tpu_custom_call.1} parent=1 // pred_check
      _
    $region23: #{tpu_custom_call.1} parent=1 // pred_check_branch
      %27 = sbr.rel (0) target = $region25
    $region24: #{tpu_custom_call.1} parent=1 // pred_region
      _
    $region25: #{tpu_custom_call.1} parent=1 // pred_fallthru
      _
    %v28 = vld [vmem:[%s4] sm:$0xff]
    %v29 = vld [vmem:[%s4 + $0x8] sm:$0xff]
    %v30 = vld [vmem:[%s4 + $0x10] sm:$0xff]
    %v31 = vld [vmem:[%s4 + $0x18] sm:$0xff]
    %v32 = vld [vmem:[%s4 + $0x20] sm:$0xf]
    %v33 = vld [vmem:[%s0] sm:$0xff]
    %v34 = vld [vmem:[%s0 + $0x8] sm:$0xff]
    %v35 = vld [vmem:[%s0 + $0x10] sm:$0xff]
    %v36 = vld [vmem:[%s0 + $0x18] sm:$0xff]
    %v37 = vld [vmem:[%s0 + $0x20] sm:$0xff]
    %v38 = vld [vmem:[%s0 + $0x28] sm:$0xff]
    %v39 = vld [vmem:[%s0 + $0x30] sm:$0xff]
    %v40 = vld [vmem:[%s0 + $0x38] sm:$0xff]
    %v41 = vld [vmem:[%s0 + $0x40] sm:$0xff]
    %v42 = vld [vmem:[%s0 + $0x48] sm:$0xff]
    %v43 = vld [vmem:[%s0 + $0x50] sm:$0xff]
    %v44 = vld [vmem:[%s0 + $0x58] sm:$0xff]
    %v45 = vld [vmem:[%s0 + $0x60] sm:$0xff]
    %v46 = vld [vmem:[%s0 + $0x68] sm:$0xff]
    %v47 = vld [vmem:[%s0 + $0x70] sm:$0xff]
    %v48 = vld [vmem:[%s0 + $0x78] sm:$0xff]
    %vm49 = vcmask 293888
    %v51 = vsel %vm49, %v33, 0
    %v54 = vsel %vm49, %v34, 0
    %v57 = vsel %vm49, %v35, 0
    %v60 = vsel %vm49, %v36, 0
    %v63 = vsel %vm49, %v37, 0
    %v66 = vsel %vm49, %v38, 0
    %v69 = vsel %vm49, %v39, 0
    %v72 = vsel %vm49, %v40, 0
    %v75 = vsel %vm49, %v41, 0
    %v78 = vsel %vm49, %v42, 0
    %v81 = vsel %vm49, %v43, 0
    %v84 = vsel %vm49, %v44, 0
    %v87 = vsel %vm49, %v45, 0
    %v90 = vsel %vm49, %v46, 0
    %v93 = vsel %vm49, %v47, 0
    %v96 = vsel %vm49, %v48, 0
    %vm98 = vcmask 1043456
    %v100 = vsel %vm98, %v32, 0
    %102 = vmatprep.subr.mxu0 0.0
    %103 = vmatpush1.msra.mxu0 %v28
    %104 = vmatprep.subr.mxu0 0.0
    %105 = vmatpush1.msra.mxu0 %v29
    %106 = vmatprep.subr.mxu0 0.0
    %107 = vmatpush1.msra.mxu0 %v30
    %108 = vmatprep.subr.mxu0 0.0
    %109 = vmatpush1.msra.mxu0 %v31
    %110 = vmatprep.subr.mxu0 0.0
    %111 = vmatpush1.msra.mxu0 %v100
    %112 = vmatprep.subr.mxu0 0.0
    %113 = vmatpush1.msra.mxu0 0.0
    %114 = vmatprep.subr.mxu0 0.0
    %115 = vmatpush1.msra.mxu0 0.0
    %116 = vmatprep.subr.mxu0 0.0
    %117 = vmatpush1.msra.mxu0 0.0
    %118 = vmatprep.subr.mxu0 0.0
    %119 = vmatpush1.msra.mxu0 0.0
    %120 = vmatprep.subr.mxu0 0.0
    %121 = vmatpush1.msra.mxu0 0.0
    %122 = vmatprep.subr.mxu0 0.0
    %123 = vmatpush1.msra.mxu0 0.0
    %124 = vmatprep.subr.mxu0 0.0
    %125 = vmatpush1.msra.mxu0 0.0
    %126 = vmatprep.subr.mxu0 0.0
    %127 = vmatpush1.msra.mxu0 0.0
    %128 = vmatprep.subr.mxu0 0.0
    %129 = vmatpush1.msra.mxu0 0.0
    %130 = vmatprep.subr.mxu0 0.0
    %131 = vmatpush1.msra.mxu0 0.0
    %132 = vmatprep.subr.mxu0 0.0
    %133 = vmatpush1.msra.mxu0 0.0
    %134 = vmatprep.subr.mxu0 0.0
    %135 = vmatpush1.msra.mxu0 0.0
    %136 = vmatprep.subr.mxu0 0.0
    %137 = vmatpush1.msra.mxu0 0.0
    %138 = vmatprep.subr.mxu0 0.0
    %139 = vmatpush1.msra.mxu0 0.0
    %140 = vmatprep.subr.mxu0 0.0
    %141 = vmatpush1.msra.mxu0 0.0
    %142 = vmatprep.subr.mxu0 0.0
    %143 = vmatpush1.msra.mxu0 0.0
    %144 = vmatprep.subr.mxu0 0.0
    %145 = vmatpush1.msra.mxu0 0.0
    %146 = vmatprep.subr.mxu0 0.0
    %147 = vmatpush1.msra.mxu0 0.0
    %148 = vmatprep.subr.mxu0 0.0
    %149 = vmatpush1.msra.mxu0 0.0
    %150 = vmatprep.subr.mxu0 0.0
    %151 = vmatpush1.msra.mxu0 0.0
    %152 = vmatprep.subr.mxu0 0.0
    %153 = vmatpush1.msra.mxu0 0.0
    %154 = vmatprep.subr.mxu0 0.0
    %155 = vmatpush1.msra.mxu0 0.0
    %156 = vmatprep.subr.mxu0 0.0
    %157 = vmatpush1.msra.mxu0 0.0
    %158 = vmatprep.subr.mxu0 0.0
    %159 = vmatpush1.msra.mxu0 0.0
    %160 = vmatprep.subr.mxu0 0.0
    %161 = vmatpush1.msra.mxu0 0.0
    %162 = vmatprep.subr.mxu0 0.0
    %163 = vmatpush1.msra.mxu0 0.0
    %164 = vmatprep.subr.mxu0 0.0
    %165 = vmatpush1.msra.mxu0 0.0
    %166 = vmatprep.mubr.f32.mxu0 0.0
    %167 = vmatmul.mubr.f32.gmra.mrb[0].mxu0 %v51
    %v168 = vpop.f32.mrb[0].mxu0
    %v169 = vadd.f32 0.0, %v168
    %v170 = vpop.f32.mrb[0].mxu0
    %171 = vmatprep.mubr.f32.mxu0 0.0
    %172 = vmatmul.mubr.f32.gmra.mrb[0].mxu0 %v54
    %v173 = vpop.f32.mrb[0].mxu0
    %v174 = vadd.f32 0.0, %v173
    %v175 = vpop.f32.mrb[0].mxu0
    %176 = vmatprep.mubr.f32.mxu0 0.0
    %177 = vmatmul.mubr.f32.gmra.mrb[0].mxu0 %v57
    %v178 = vpop.f32.mrb[0].mxu0
    %v179 = vadd.f32 0.0, %v178
    %v180 = vpop.f32.mrb[0].mxu0
    %181 = vmatprep.mubr.f32.mxu0 0.0
    %182 = vmatmul.mubr.f32.gmra.mrb[0].mxu0 %v60
    %v183 = vpop.f32.mrb[0].mxu0
    %v184 = vadd.f32 0.0, %v183
    %v185 = vpop.f32.mrb[0].mxu0
    %186 = vmatprep.mubr.f32.mxu0 0.0
    %187 = vmatmul.mubr.f32.gmra.mrb[0].mxu0 %v63
    %v188 = vpop.f32.mrb[0].mxu0
    %v189 = vadd.f32 0.0, %v188
    %v190 = vpop.f32.mrb[0].mxu0
    %191 = vmatprep.mubr.f32.mxu0 0.0
    %192 = vmatmul.mubr.f32.gmra.mrb[0].mxu0 %v66
    %v193 = vpop.f32.mrb[0].mxu0
    %v194 = vadd.f32 0.0, %v193
    %v195 = vpop.f32.mrb[0].mxu0
    %196 = vmatprep.mubr.f32.mxu0 0.0
    %197 = vmatmul.mubr.f32.gmra.mrb[0].mxu0 %v69
    %v198 = vpop.f32.mrb[0].mxu0
    %v199 = vadd.f32 0.0, %v198
    %v200 = vpop.f32.mrb[0].mxu0
    %201 = vmatprep.mubr.f32.mxu0 0.0
    %202 = vmatmul.mubr.f32.gmra.mrb[0].mxu0 %v72
    %v203 = vpop.f32.mrb[0].mxu0
    %v204 = vadd.f32 0.0, %v203
    %v205 = vpop.f32.mrb[0].mxu0
    %206 = vmatprep.mubr.f32.mxu0 0.0
    %207 = vmatmul.mubr.f32.gmra.mrb[0].mxu0 %v75
    %v208 = vpop.f32.mrb[0].mxu0
    %v209 = vadd.f32 0.0, %v208
    %v210 = vpop.f32.mrb[0].mxu0
    %211 = vmatprep.mubr.f32.mxu0 0.0
    %212 = vmatmul.mubr.f32.gmra.mrb[0].mxu0 %v78
    %v213 = vpop.f32.mrb[0].mxu0
    %v214 = vadd.f32 0.0, %v213
    %v215 = vpop.f32.mrb[0].mxu0
    %216 = vmatprep.mubr.f32.mxu0 0.0
    %217 = vmatmul.mubr.f32.gmra.mrb[0].mxu0 %v81
    %v218 = vpop.f32.mrb[0].mxu0
    %v219 = vadd.f32 0.0, %v218
    %v220 = vpop.f32.mrb[0].mxu0
    %221 = vmatprep.mubr.f32.mxu0 0.0
    %222 = vmatmul.mubr.f32.gmra.mrb[0].mxu0 %v84
    %v223 = vpop.f32.mrb[0].mxu0
    %v224 = vadd.f32 0.0, %v223
    %v225 = vpop.f32.mrb[0].mxu0
    %226 = vmatprep.mubr.f32.mxu0 0.0
    %227 = vmatmul.mubr.f32.gmra.mrb[0].mxu0 %v87
    %v228 = vpop.f32.mrb[0].mxu0
    %v229 = vadd.f32 0.0, %v228
    %v230 = vpop.f32.mrb[0].mxu0
    %231 = vmatprep.mubr.f32.mxu0 0.0
    %232 = vmatmul.mubr.f32.gmra.mrb[0].mxu0 %v90
    %v233 = vpop.f32.mrb[0].mxu0
    %v234 = vadd.f32 0.0, %v233
    %v235 = vpop.f32.mrb[0].mxu0
    %236 = vmatprep.mubr.f32.mxu0 0.0
    %237 = vmatmul.mubr.f32.gmra.mrb[0].mxu0 %v93
    %v238 = vpop.f32.mrb[0].mxu0
    %v239 = vadd.f32 0.0, %v238
    %v240 = vpop.f32.mrb[0].mxu0
    %241 = vmatprep.mubr.f32.mxu0 0.0
    %242 = vmatmul.mubr.f32.gmra.mrb[0].mxu0 %v96
    %v243 = vpop.f32.mrb[0].mxu0
    %v244 = vadd.f32 0.0, %v243
    %v245 = vpop.f32.mrb[0].mxu0
    %246 = vdwg.mxu0
    %v247 = vld [vmem:[%s1] sm:$0xff]
    %v248 = vld [vmem:[%s1 + $0x8] sm:$0xff]
    %v249 = vld [vmem:[%s1 + $0x10] sm:$0xff]
    %v250 = vld [vmem:[%s1 + $0x18] sm:$0xff]
    %v251 = vld [vmem:[%s1 + $0x20] sm:$0xff]
    %v252 = vld [vmem:[%s1 + $0x28] sm:$0xff]
    %v253 = vld [vmem:[%s1 + $0x30] sm:$0xff]
    %v254 = vld [vmem:[%s1 + $0x38] sm:$0xff]
    %v255 = vld [vmem:[%s1 + $0x40] sm:$0xff]
    %v256 = vld [vmem:[%s1 + $0x48] sm:$0xff]
    %v257 = vld [vmem:[%s1 + $0x50] sm:$0xff]
    %v258 = vld [vmem:[%s1 + $0x58] sm:$0xff]
    %v259 = vld [vmem:[%s1 + $0x60] sm:$0xff]
    %v260 = vld [vmem:[%s1 + $0x68] sm:$0xff]
    %v261 = vld [vmem:[%s1 + $0x70] sm:$0xff]
    %v262 = vld [vmem:[%s1 + $0x78] sm:$0xff]
    %v264 = vsel %vm49, %v247, 0
    %v267 = vsel %vm49, %v248, 0
    %v270 = vsel %vm49, %v249, 0
    %v273 = vsel %vm49, %v250, 0
    %v276 = vsel %vm49, %v251, 0
    %v279 = vsel %vm49, %v252, 0
    %v282 = vsel %vm49, %v253, 0
    %v285 = vsel %vm49, %v254, 0
    %v288 = vsel %vm49, %v255, 0
    %v291 = vsel %vm49, %v256, 0
    %v294 = vsel %vm49, %v257, 0
    %v297 = vsel %vm49, %v258, 0
    %v300 = vsel %vm49, %v259, 0
    %v303 = vsel %vm49, %v260, 0
    %v306 = vsel %vm49, %v261, 0
    %v309 = vsel %vm49, %v262, 0
    %311 = vmatprep.subr.mxu0 0.0
    %312 = vmatpush1.msra.mxu0 %v28
    %313 = vmatprep.subr.mxu0 0.0
    %314 = vmatpush1.msra.mxu0 %v29
    %315 = vmatprep.subr.mxu0 0.0
    %316 = vmatpush1.msra.mxu0 %v30
    %317 = vmatprep.subr.mxu0 0.0
    %318 = vmatpush1.msra.mxu0 %v31
    %319 = vmatprep.subr.mxu0 0.0
    %320 = vmatpush1.msra.mxu0 %v100
    %321 = vmatprep.subr.mxu0 0.0
    %322 = vmatpush1.msra.mxu0 0.0
    %323 = vmatprep.subr.mxu0 0.0
    %324 = vmatpush1.msra.mxu0 0.0
    %325 = vmatprep.subr.mxu0 0.0
    %326 = vmatpush1.msra.mxu0 0.0
    %327 = vmatprep.subr.mxu0 0.0
    %328 = vmatpush1.msra.mxu0 0.0
    %329 = vmatprep.subr.mxu0 0.0
    %330 = vmatpush1.msra.mxu0 0.0
    %331 = vmatprep.subr.mxu0 0.0
    %332 = vmatpush1.msra.mxu0 0.0
    %333 = vmatprep.subr.mxu0 0.0
    %334 = vmatpush1.msra.mxu0 0.0
    %335 = vmatprep.subr.mxu0 0.0
    %336 = vmatpush1.msra.mxu0 0.0
    %337 = vmatprep.subr.mxu0 0.0
    %338 = vmatpush1.msra.mxu0 0.0
    %339 = vmatprep.subr.mxu0 0.0
    %340 = vmatpush1.msra.mxu0 0.0
    %341 = vmatprep.subr.mxu0 0.0
    %342 = vmatpush1.msra.mxu0 0.0
    %343 = vmatprep.subr.mxu0 0.0
    %344 = vmatpush1.msra.mxu0 0.0
    %345 = vmatprep.subr.mxu0 0.0
    %346 = vmatpush1.msra.mxu0 0.0
    %347 = vmatprep.subr.mxu0 0.0
    %348 = vmatpush1.msra.mxu0 0.0
    %349 = vmatprep.subr.mxu0 0.0
    %350 = vmatpush1.msra.mxu0 0.0
    %351 = vmatprep.subr.mxu0 0.0
    %352 = vmatpush1.msra.mxu0 0.0
    %353 = vmatprep.subr.mxu0 0.0
    %354 = vmatpush1.msra.mxu0 0.0
    %355 = vmatprep.subr.mxu0 0.0
    %356 = vmatpush1.msra.mxu0 0.0
    %357 = vmatprep.subr.mxu0 0.0
    %358 = vmatpush1.msra.mxu0 0.0
    %359 = vmatprep.subr.mxu0 0.0
    %360 = vmatpush1.msra.mxu0 0.0
    %361 = vmatprep.subr.mxu0 0.0
    %362 = vmatpush1.msra.mxu0 0.0
    %363 = vmatprep.subr.mxu0 0.0
    %364 = vmatpush1.msra.mxu0 0.0
    %365 = vmatprep.subr.mxu0 0.0
    %366 = vmatpush1.msra.mxu0 0.0
    %367 = vmatprep.subr.mxu0 0.0
    %368 = vmatpush1.msra.mxu0 0.0
    %369 = vmatprep.subr.mxu0 0.0
    %370 = vmatpush1.msra.mxu0 0.0
    %371 = vmatprep.subr.mxu0 0.0
    %372 = vmatpush1.msra.mxu0 0.0
    %373 = vmatprep.subr.mxu0 0.0
    %374 = vmatpush1.msra.mxu0 0.0
    %375 = vmatprep.mubr.f32.mxu0 0.0
    %376 = vmatmul.mubr.f32.gmra.mrb[0].mxu0 %v264
    %v377 = vpop.f32.mrb[0].mxu0
    %v378 = vadd.f32 0.0, %v377
    %v379 = vpop.f32.mrb[0].mxu0
    %380 = vmatprep.mubr.f32.mxu0 0.0
    %381 = vmatmul.mubr.f32.gmra.mrb[0].mxu0 %v267
    %v382 = vpop.f32.mrb[0].mxu0
    %v383 = vadd.f32 0.0, %v382
    %v384 = vpop.f32.mrb[0].mxu0
    %385 = vmatprep.mubr.f32.mxu0 0.0
    %386 = vmatmul.mubr.f32.gmra.mrb[0].mxu0 %v270
    %v387 = vpop.f32.mrb[0].mxu0
    %v388 = vadd.f32 0.0, %v387
    %v389 = vpop.f32.mrb[0].mxu0
    %390 = vmatprep.mubr.f32.mxu0 0.0
    %391 = vmatmul.mubr.f32.gmra.mrb[0].mxu0 %v273
    %v392 = vpop.f32.mrb[0].mxu0
    %v393 = vadd.f32 0.0, %v392
    %v394 = vpop.f32.mrb[0].mxu0
    %395 = vmatprep.mubr.f32.mxu0 0.0
    %396 = vmatmul.mubr.f32.gmra.mrb[0].mxu0 %v276
    %v397 = vpop.f32.mrb[0].mxu0
    %v398 = vadd.f32 0.0, %v397
    %v399 = vpop.f32.mrb[0].mxu0
    %400 = vmatprep.mubr.f32.mxu0 0.0
    %401 = vmatmul.mubr.f32.gmra.mrb[0].mxu0 %v279
    %v402 = vpop.f32.mrb[0].mxu0
    %v403 = vadd.f32 0.0, %v402
    %v404 = vpop.f32.mrb[0].mxu0
    %405 = vmatprep.mubr.f32.mxu0 0.0
    %406 = vmatmul.mubr.f32.gmra.mrb[0].mxu0 %v282
    %v407 = vpop.f32.mrb[0].mxu0
    %v408 = vadd.f32 0.0, %v407
    %v409 = vpop.f32.mrb[0].mxu0
    %410 = vmatprep.mubr.f32.mxu0 0.0
    %411 = vmatmul.mubr.f32.gmra.mrb[0].mxu0 %v285
    %v412 = vpop.f32.mrb[0].mxu0
    %v413 = vadd.f32 0.0, %v412
    %v414 = vpop.f32.mrb[0].mxu0
    %415 = vmatprep.mubr.f32.mxu0 0.0
    %416 = vmatmul.mubr.f32.gmra.mrb[0].mxu0 %v288
    %v417 = vpop.f32.mrb[0].mxu0
    %v418 = vadd.f32 0.0, %v417
    %v419 = vpop.f32.mrb[0].mxu0
    %420 = vmatprep.mubr.f32.mxu0 0.0
    %421 = vmatmul.mubr.f32.gmra.mrb[0].mxu0 %v291
    %v422 = vpop.f32.mrb[0].mxu0
    %v423 = vadd.f32 0.0, %v422
    %v424 = vpop.f32.mrb[0].mxu0
    %425 = vmatprep.mubr.f32.mxu0 0.0
    %426 = vmatmul.mubr.f32.gmra.mrb[0].mxu0 %v294
    %v427 = vpop.f32.mrb[0].mxu0
    %v428 = vadd.f32 0.0, %v427
    %v429 = vpop.f32.mrb[0].mxu0
    %430 = vmatprep.mubr.f32.mxu0 0.0
    %431 = vmatmul.mubr.f32.gmra.mrb[0].mxu0 %v297
    %v432 = vpop.f32.mrb[0].mxu0
    %v433 = vadd.f32 0.0, %v432
    %v434 = vpop.f32.mrb[0].mxu0
    %435 = vmatprep.mubr.f32.mxu0 0.0
    %436 = vmatmul.mubr.f32.gmra.mrb[0].mxu0 %v300
    %v437 = vpop.f32.mrb[0].mxu0
    %v438 = vadd.f32 0.0, %v437
    %v439 = vpop.f32.mrb[0].mxu0
    %440 = vmatprep.mubr.f32.mxu0 0.0
    %441 = vmatmul.mubr.f32.gmra.mrb[0].mxu0 %v303
    %v442 = vpop.f32.mrb[0].mxu0
    %v443 = vadd.f32 0.0, %v442
    %v444 = vpop.f32.mrb[0].mxu0
    %445 = vmatprep.mubr.f32.mxu0 0.0
    %446 = vmatmul.mubr.f32.gmra.mrb[0].mxu0 %v306
    %v447 = vpop.f32.mrb[0].mxu0
    %v448 = vadd.f32 0.0, %v447
    %v449 = vpop.f32.mrb[0].mxu0
    %450 = vmatprep.mubr.f32.mxu0 0.0
    %451 = vmatmul.mubr.f32.gmra.mrb[0].mxu0 %v309
    %v452 = vpop.f32.mrb[0].mxu0
    %v453 = vadd.f32 0.0, %v452
    %v454 = vpop.f32.mrb[0].mxu0
    %455 = vdwg.mxu0
    %v456 = vmax.f32 %v169, %v378
    %v457 = vmax.f32 %v174, %v383
    %v458 = vmax.f32 %v179, %v388
    %v459 = vmax.f32 %v184, %v393
    %v460 = vmax.f32 %v189, %v398
    %v461 = vmax.f32 %v194, %v403
    %v462 = vmax.f32 %v199, %v408
    %v463 = vmax.f32 %v204, %v413
    %v464 = vmax.f32 %v209, %v418
    %v465 = vmax.f32 %v214, %v423
    %v466 = vmax.f32 %v219, %v428
    %v467 = vmax.f32 %v224, %v433
    %v468 = vmax.f32 %v229, %v438
    %v469 = vmax.f32 %v234, %v443
    %v470 = vmax.f32 %v239, %v448
    %v471 = vmax.f32 %v244, %v453
    %v472 = vld [vmem:[%s2] sm:$0xff]
    %v473 = vld [vmem:[%s2 + $0x8] sm:$0xff]
    %v474 = vld [vmem:[%s2 + $0x10] sm:$0xff]
    %v475 = vld [vmem:[%s2 + $0x18] sm:$0xff]
    %v476 = vld [vmem:[%s2 + $0x20] sm:$0xff]
    %v477 = vld [vmem:[%s2 + $0x28] sm:$0xff]
    %v478 = vld [vmem:[%s2 + $0x30] sm:$0xff]
    %v479 = vld [vmem:[%s2 + $0x38] sm:$0xff]
    %v480 = vld [vmem:[%s2 + $0x40] sm:$0xff]
    %v481 = vld [vmem:[%s2 + $0x48] sm:$0xff]
    %v482 = vld [vmem:[%s2 + $0x50] sm:$0xff]
    %v483 = vld [vmem:[%s2 + $0x58] sm:$0xff]
    %v484 = vld [vmem:[%s2 + $0x60] sm:$0xff]
    %v485 = vld [vmem:[%s2 + $0x68] sm:$0xff]
    %v486 = vld [vmem:[%s2 + $0x70] sm:$0xff]
    %v487 = vld [vmem:[%s2 + $0x78] sm:$0xff]
    %v489 = vsel %vm49, %v472, 0
    %v492 = vsel %vm49, %v473, 0
    %v495 = vsel %vm49, %v474, 0
    %v498 = vsel %vm49, %v475, 0
    %v501 = vsel %vm49, %v476, 0
    %v504 = vsel %vm49, %v477, 0
    %v507 = vsel %vm49, %v478, 0
    %v510 = vsel %vm49, %v479, 0
    %v513 = vsel %vm49, %v480, 0
    %v516 = vsel %vm49, %v481, 0
    %v519 = vsel %vm49, %v482, 0
    %v522 = vsel %vm49, %v483, 0
    %v525 = vsel %vm49, %v484, 0
    %v528 = vsel %vm49, %v485, 0
    %v531 = vsel %vm49, %v486, 0
    %v534 = vsel %vm49, %v487, 0
    %536 = vmatprep.subr.mxu0 0.0
    %537 = vmatpush1.msra.mxu0 %v28
    %538 = vmatprep.subr.mxu0 0.0
    %539 = vmatpush1.msra.mxu0 %v29
    %540 = vmatprep.subr.mxu0 0.0
    %541 = vmatpush1.msra.mxu0 %v30
    %542 = vmatprep.subr.mxu0 0.0
    %543 = vmatpush1.msra.mxu0 %v31
    %544 = vmatprep.subr.mxu0 0.0
    %545 = vmatpush1.msra.mxu0 %v100
    %546 = vmatprep.subr.mxu0 0.0
    %547 = vmatpush1.msra.mxu0 0.0
    %548 = vmatprep.subr.mxu0 0.0
    %549 = vmatpush1.msra.mxu0 0.0
    %550 = vmatprep.subr.mxu0 0.0
    %551 = vmatpush1.msra.mxu0 0.0
    %552 = vmatprep.subr.mxu0 0.0
    %553 = vmatpush1.msra.mxu0 0.0
    %554 = vmatprep.subr.mxu0 0.0
    %555 = vmatpush1.msra.mxu0 0.0
    %556 = vmatprep.subr.mxu0 0.0
    %557 = vmatpush1.msra.mxu0 0.0
    %558 = vmatprep.subr.mxu0 0.0
    %559 = vmatpush1.msra.mxu0 0.0
    %560 = vmatprep.subr.mxu0 0.0
    %561 = vmatpush1.msra.mxu0 0.0
    %562 = vmatprep.subr.mxu0 0.0
    %563 = vmatpush1.msra.mxu0 0.0
    %564 = vmatprep.subr.mxu0 0.0
    %565 = vmatpush1.msra.mxu0 0.0
    %566 = vmatprep.subr.mxu0 0.0
    %567 = vmatpush1.msra.mxu0 0.0
    %568 = vmatprep.subr.mxu0 0.0
    %569 = vmatpush1.msra.mxu0 0.0
    %570 = vmatprep.subr.mxu0 0.0
    %571 = vmatpush1.msra.mxu0 0.0
    %572 = vmatprep.subr.mxu0 0.0
    %573 = vmatpush1.msra.mxu0 0.0
    %574 = vmatprep.subr.mxu0 0.0
    %575 = vmatpush1.msra.mxu0 0.0
    %576 = vmatprep.subr.mxu0 0.0
    %577 = vmatpush1.msra.mxu0 0.0
    %578 = vmatprep.subr.mxu0 0.0
    %579 = vmatpush1.msra.mxu0 0.0
    %580 = vmatprep.subr.mxu0 0.0
    %581 = vmatpush1.msra.mxu0 0.0
    %582 = vmatprep.subr.mxu0 0.0
    %583 = vmatpush1.msra.mxu0 0.0
    %584 = vmatprep.subr.mxu0 0.0
    %585 = vmatpush1.msra.mxu0 0.0
    %586 = vmatprep.subr.mxu0 0.0
    %587 = vmatpush1.msra.mxu0 0.0
    %588 = vmatprep.subr.mxu0 0.0
    %589 = vmatpush1.msra.mxu0 0.0
    %590 = vmatprep.subr.mxu0 0.0
    %591 = vmatpush1.msra.mxu0 0.0
    %592 = vmatprep.subr.mxu0 0.0
    %593 = vmatpush1.msra.mxu0 0.0
    %594 = vmatprep.subr.mxu0 0.0
    %595 = vmatpush1.msra.mxu0 0.0
    %596 = vmatprep.subr.mxu0 0.0
    %597 = vmatpush1.msra.mxu0 0.0
    %598 = vmatprep.subr.mxu0 0.0
    %599 = vmatpush1.msra.mxu0 0.0
    %600 = vmatprep.mubr.f32.mxu0 0.0
    %601 = vmatmul.mubr.f32.gmra.mrb[0].mxu0 %v489
    %v602 = vpop.f32.mrb[0].mxu0
    %v603 = vadd.f32 0.0, %v602
    %v604 = vpop.f32.mrb[0].mxu0
    %605 = vmatprep.mubr.f32.mxu0 0.0
    %606 = vmatmul.mubr.f32.gmra.mrb[0].mxu0 %v492
    %v607 = vpop.f32.mrb[0].mxu0
    %v608 = vadd.f32 0.0, %v607
    %v609 = vpop.f32.mrb[0].mxu0
    %610 = vmatprep.mubr.f32.mxu0 0.0
    %611 = vmatmul.mubr.f32.gmra.mrb[0].mxu0 %v495
    %v612 = vpop.f32.mrb[0].mxu0
    %v613 = vadd.f32 0.0, %v612
    %v614 = vpop.f32.mrb[0].mxu0
    %615 = vmatprep.mubr.f32.mxu0 0.0
    %616 = vmatmul.mubr.f32.gmra.mrb[0].mxu0 %v498
    %v617 = vpop.f32.mrb[0].mxu0
    %v618 = vadd.f32 0.0, %v617
    %v619 = vpop.f32.mrb[0].mxu0
    %620 = vmatprep.mubr.f32.mxu0 0.0
    %621 = vmatmul.mubr.f32.gmra.mrb[0].mxu0 %v501
    %v622 = vpop.f32.mrb[0].mxu0
    %v623 = vadd.f32 0.0, %v622
    %v624 = vpop.f32.mrb[0].mxu0
    %625 = vmatprep.mubr.f32.mxu0 0.0
    %626 = vmatmul.mubr.f32.gmra.mrb[0].mxu0 %v504
    %v627 = vpop.f32.mrb[0].mxu0
    %v628 = vadd.f32 0.0, %v627
    %v629 = vpop.f32.mrb[0].mxu0
    %630 = vmatprep.mubr.f32.mxu0 0.0
    %631 = vmatmul.mubr.f32.gmra.mrb[0].mxu0 %v507
    %v632 = vpop.f32.mrb[0].mxu0
    %v633 = vadd.f32 0.0, %v632
    %v634 = vpop.f32.mrb[0].mxu0
    %635 = vmatprep.mubr.f32.mxu0 0.0
    %636 = vmatmul.mubr.f32.gmra.mrb[0].mxu0 %v510
    %v637 = vpop.f32.mrb[0].mxu0
    %v638 = vadd.f32 0.0, %v637
    %v639 = vpop.f32.mrb[0].mxu0
    %640 = vmatprep.mubr.f32.mxu0 0.0
    %641 = vmatmul.mubr.f32.gmra.mrb[0].mxu0 %v513
    %v642 = vpop.f32.mrb[0].mxu0
    %v643 = vadd.f32 0.0, %v642
    %v644 = vpop.f32.mrb[0].mxu0
    %645 = vmatprep.mubr.f32.mxu0 0.0
    %646 = vmatmul.mubr.f32.gmra.mrb[0].mxu0 %v516
    %v647 = vpop.f32.mrb[0].mxu0
    %v648 = vadd.f32 0.0, %v647
    %v649 = vpop.f32.mrb[0].mxu0
    %650 = vmatprep.mubr.f32.mxu0 0.0
    %651 = vmatmul.mubr.f32.gmra.mrb[0].mxu0 %v519
    %v652 = vpop.f32.mrb[0].mxu0
    %v653 = vadd.f32 0.0, %v652
    %v654 = vpop.f32.mrb[0].mxu0
    %655 = vmatprep.mubr.f32.mxu0 0.0
    %656 = vmatmul.mubr.f32.gmra.mrb[0].mxu0 %v522
    %v657 = vpop.f32.mrb[0].mxu0
    %v658 = vadd.f32 0.0, %v657
    %v659 = vpop.f32.mrb[0].mxu0
    %660 = vmatprep.mubr.f32.mxu0 0.0
    %661 = vmatmul.mubr.f32.gmra.mrb[0].mxu0 %v525
    %v662 = vpop.f32.mrb[0].mxu0
    %v663 = vadd.f32 0.0, %v662
    %v664 = vpop.f32.mrb[0].mxu0
    %665 = vmatprep.mubr.f32.mxu0 0.0
    %666 = vmatmul.mubr.f32.gmra.mrb[0].mxu0 %v528
    %v667 = vpop.f32.mrb[0].mxu0
    %v668 = vadd.f32 0.0, %v667
    %v669 = vpop.f32.mrb[0].mxu0
    %670 = vmatprep.mubr.f32.mxu0 0.0
    %671 = vmatmul.mubr.f32.gmra.mrb[0].mxu0 %v531
    %v672 = vpop.f32.mrb[0].mxu0
    %v673 = vadd.f32 0.0, %v672
    %v674 = vpop.f32.mrb[0].mxu0
    %675 = vmatprep.mubr.f32.mxu0 0.0
    %676 = vmatmul.mubr.f32.gmra.mrb[0].mxu0 %v534
    %v677 = vpop.f32.mrb[0].mxu0
    %v678 = vadd.f32 0.0, %v677
    %v679 = vpop.f32.mrb[0].mxu0
    %680 = vdwg.mxu0
    %v681 = vmax.f32 %v456, %v603
    %v682 = vmax.f32 %v457, %v608
    %v683 = vmax.f32 %v458, %v613
    %v684 = vmax.f32 %v459, %v618
    %v685 = vmax.f32 %v460, %v623
    %v686 = vmax.f32 %v461, %v628
    %v687 = vmax.f32 %v462, %v633
    %v688 = vmax.f32 %v463, %v638
    %v689 = vmax.f32 %v464, %v643
    %v690 = vmax.f32 %v465, %v648
    %v691 = vmax.f32 %v466, %v653
    %v692 = vmax.f32 %v467, %v658
    %v693 = vmax.f32 %v468, %v663
    %v694 = vmax.f32 %v469, %v668
    %v695 = vmax.f32 %v470, %v673
    %v696 = vmax.f32 %v471, %v678
    %v697 = vld [vmem:[%s3] sm:$0xff]
    %v698 = vld [vmem:[%s3 + $0x8] sm:$0xff]
    %v699 = vld [vmem:[%s3 + $0x10] sm:$0xff]
    %v700 = vld [vmem:[%s3 + $0x18] sm:$0xff]
    %v701 = vld [vmem:[%s3 + $0x20] sm:$0xff]
    %v702 = vld [vmem:[%s3 + $0x28] sm:$0xff]
    %v703 = vld [vmem:[%s3 + $0x30] sm:$0xff]
    %v704 = vld [vmem:[%s3 + $0x38] sm:$0xff]
    %v705 = vld [vmem:[%s3 + $0x40] sm:$0xff]
    %v706 = vld [vmem:[%s3 + $0x48] sm:$0xff]
    %v707 = vld [vmem:[%s3 + $0x50] sm:$0xff]
    %v708 = vld [vmem:[%s3 + $0x58] sm:$0xff]
    %v709 = vld [vmem:[%s3 + $0x60] sm:$0xff]
    %v710 = vld [vmem:[%s3 + $0x68] sm:$0xff]
    %v711 = vld [vmem:[%s3 + $0x70] sm:$0xff]
    %v712 = vld [vmem:[%s3 + $0x78] sm:$0xff]
    %v714 = vsel %vm49, %v697, 0
    %v717 = vsel %vm49, %v698, 0
    %v720 = vsel %vm49, %v699, 0
    %v723 = vsel %vm49, %v700, 0
    %v726 = vsel %vm49, %v701, 0
    %v729 = vsel %vm49, %v702, 0
    %v732 = vsel %vm49, %v703, 0
    %v735 = vsel %vm49, %v704, 0
    %v738 = vsel %vm49, %v705, 0
    %v741 = vsel %vm49, %v706, 0
    %v744 = vsel %vm49, %v707, 0
    %v747 = vsel %vm49, %v708, 0
    %v750 = vsel %vm49, %v709, 0
    %v753 = vsel %vm49, %v710, 0
    %v756 = vsel %vm49, %v711, 0
    %v759 = vsel %vm49, %v712, 0
    %761 = vmatprep.subr.mxu0 0.0
    %762 = vmatpush1.msra.mxu0 %v28
    %763 = vmatprep.subr.mxu0 0.0
    %764 = vmatpush1.msra.mxu0 %v29
    %765 = vmatprep.subr.mxu0 0.0
    %766 = vmatpush1.msra.mxu0 %v30
    %767 = vmatprep.subr.mxu0 0.0
    %768 = vmatpush1.msra.mxu0 %v31
    %769 = vmatprep.subr.mxu0 0.0
    %770 = vmatpush1.msra.mxu0 %v100
    %771 = vmatprep.subr.mxu0 0.0
    %772 = vmatpush1.msra.mxu0 0.0
    %773 = vmatprep.subr.mxu0 0.0
    %774 = vmatpush1.msra.mxu0 0.0
    %775 = vmatprep.subr.mxu0 0.0
    %776 = vmatpush1.msra.mxu0 0.0
    %777 = vmatprep.subr.mxu0 0.0
    %778 = vmatpush1.msra.mxu0 0.0
    %779 = vmatprep.subr.mxu0 0.0
    %780 = vmatpush1.msra.mxu0 0.0
    %781 = vmatprep.subr.mxu0 0.0
    %782 = vmatpush1.msra.mxu0 0.0
    %783 = vmatprep.subr.mxu0 0.0
    %784 = vmatpush1.msra.mxu0 0.0
    %785 = vmatprep.subr.mxu0 0.0
    %786 = vmatpush1.msra.mxu0 0.0
    %787 = vmatprep.subr.mxu0 0.0
    %788 = vmatpush1.msra.mxu0 0.0
    %789 = vmatprep.subr.mxu0 0.0
    %790 = vmatpush1.msra.mxu0 0.0
    %791 = vmatprep.subr.mxu0 0.0
    %792 = vmatpush1.msra.mxu0 0.0
    %793 = vmatprep.subr.mxu0 0.0
    %794 = vmatpush1.msra.mxu0 0.0
    %795 = vmatprep.subr.mxu0 0.0
    %796 = vmatpush1.msra.mxu0 0.0
    %797 = vmatprep.subr.mxu0 0.0
    %798 = vmatpush1.msra.mxu0 0.0
    %799 = vmatprep.subr.mxu0 0.0
    %800 = vmatpush1.msra.mxu0 0.0
    %801 = vmatprep.subr.mxu0 0.0
    %802 = vmatpush1.msra.mxu0 0.0
    %803 = vmatprep.subr.mxu0 0.0
    %804 = vmatpush1.msra.mxu0 0.0
    %805 = vmatprep.subr.mxu0 0.0
    %806 = vmatpush1.msra.mxu0 0.0
    %807 = vmatprep.subr.mxu0 0.0
    %808 = vmatpush1.msra.mxu0 0.0
    %809 = vmatprep.subr.mxu0 0.0
    %810 = vmatpush1.msra.mxu0 0.0
    %811 = vmatprep.subr.mxu0 0.0
    %812 = vmatpush1.msra.mxu0 0.0
    %813 = vmatprep.subr.mxu0 0.0
    %814 = vmatpush1.msra.mxu0 0.0
    %815 = vmatprep.subr.mxu0 0.0
    %816 = vmatpush1.msra.mxu0 0.0
    %817 = vmatprep.subr.mxu0 0.0
    %818 = vmatpush1.msra.mxu0 0.0
    %819 = vmatprep.subr.mxu0 0.0
    %820 = vmatpush1.msra.mxu0 0.0
    %821 = vmatprep.subr.mxu0 0.0
    %822 = vmatpush1.msra.mxu0 0.0
    %823 = vmatprep.subr.mxu0 0.0
    %824 = vmatpush1.msra.mxu0 0.0
    %825 = vmatprep.mubr.f32.mxu0 0.0
    %826 = vmatmul.mubr.f32.gmra.mrb[0].mxu0 %v714
    %v827 = vpop.f32.mrb[0].mxu0
    %v828 = vadd.f32 0.0, %v827
    %v829 = vpop.f32.mrb[0].mxu0
    %830 = vmatprep.mubr.f32.mxu0 0.0
    %831 = vmatmul.mubr.f32.gmra.mrb[0].mxu0 %v717
    %v832 = vpop.f32.mrb[0].mxu0
    %v833 = vadd.f32 0.0, %v832
    %v834 = vpop.f32.mrb[0].mxu0
    %835 = vmatprep.mubr.f32.mxu0 0.0
    %836 = vmatmul.mubr.f32.gmra.mrb[0].mxu0 %v720
    %v837 = vpop.f32.mrb[0].mxu0
    %v838 = vadd.f32 0.0, %v837
    %v839 = vpop.f32.mrb[0].mxu0
    %840 = vmatprep.mubr.f32.mxu0 0.0
    %841 = vmatmul.mubr.f32.gmra.mrb[0].mxu0 %v723
    %v842 = vpop.f32.mrb[0].mxu0
    %v843 = vadd.f32 0.0, %v842
    %v844 = vpop.f32.mrb[0].mxu0
    %845 = vmatprep.mubr.f32.mxu0 0.0
    %846 = vmatmul.mubr.f32.gmra.mrb[0].mxu0 %v726
    %v847 = vpop.f32.mrb[0].mxu0
    %v848 = vadd.f32 0.0, %v847
    %v849 = vpop.f32.mrb[0].mxu0
    %850 = vmatprep.mubr.f32.mxu0 0.0
    %851 = vmatmul.mubr.f32.gmra.mrb[0].mxu0 %v729
    %v852 = vpop.f32.mrb[0].mxu0
    %v853 = vadd.f32 0.0, %v852
    %v854 = vpop.f32.mrb[0].mxu0
    %855 = vmatprep.mubr.f32.mxu0 0.0
    %856 = vmatmul.mubr.f32.gmra.mrb[0].mxu0 %v732
    %v857 = vpop.f32.mrb[0].mxu0
    %v858 = vadd.f32 0.0, %v857
    %v859 = vpop.f32.mrb[0].mxu0
    %860 = vmatprep.mubr.f32.mxu0 0.0
    %861 = vmatmul.mubr.f32.gmra.mrb[0].mxu0 %v735
    %v862 = vpop.f32.mrb[0].mxu0
    %v863 = vadd.f32 0.0, %v862
    %v864 = vpop.f32.mrb[0].mxu0
    %865 = vmatprep.mubr.f32.mxu0 0.0
    %866 = vmatmul.mubr.f32.gmra.mrb[0].mxu0 %v738
    %v867 = vpop.f32.mrb[0].mxu0
    %v868 = vadd.f32 0.0, %v867
    %v869 = vpop.f32.mrb[0].mxu0
    %870 = vmatprep.mubr.f32.mxu0 0.0
    %871 = vmatmul.mubr.f32.gmra.mrb[0].mxu0 %v741
    %v872 = vpop.f32.mrb[0].mxu0
    %v873 = vadd.f32 0.0, %v872
    %v874 = vpop.f32.mrb[0].mxu0
    %875 = vmatprep.mubr.f32.mxu0 0.0
    %876 = vmatmul.mubr.f32.gmra.mrb[0].mxu0 %v744
    %v877 = vpop.f32.mrb[0].mxu0
    %v878 = vadd.f32 0.0, %v877
    %v879 = vpop.f32.mrb[0].mxu0
    %880 = vmatprep.mubr.f32.mxu0 0.0
    %881 = vmatmul.mubr.f32.gmra.mrb[0].mxu0 %v747
    %v882 = vpop.f32.mrb[0].mxu0
    %v883 = vadd.f32 0.0, %v882
    %v884 = vpop.f32.mrb[0].mxu0
    %885 = vmatprep.mubr.f32.mxu0 0.0
    %886 = vmatmul.mubr.f32.gmra.mrb[0].mxu0 %v750
    %v887 = vpop.f32.mrb[0].mxu0
    %v888 = vadd.f32 0.0, %v887
    %v889 = vpop.f32.mrb[0].mxu0
    %890 = vmatprep.mubr.f32.mxu0 0.0
    %891 = vmatmul.mubr.f32.gmra.mrb[0].mxu0 %v753
    %v892 = vpop.f32.mrb[0].mxu0
    %v893 = vadd.f32 0.0, %v892
    %v894 = vpop.f32.mrb[0].mxu0
    %895 = vmatprep.mubr.f32.mxu0 0.0
    %896 = vmatmul.mubr.f32.gmra.mrb[0].mxu0 %v756
    %v897 = vpop.f32.mrb[0].mxu0
    %v898 = vadd.f32 0.0, %v897
    %v899 = vpop.f32.mrb[0].mxu0
    %900 = vmatprep.mubr.f32.mxu0 0.0
    %901 = vmatmul.mubr.f32.gmra.mrb[0].mxu0 %v759
    %v902 = vpop.f32.mrb[0].mxu0
    %v903 = vadd.f32 0.0, %v902
    %v904 = vpop.f32.mrb[0].mxu0
    %905 = vdwg.mxu0
    %v906 = vmax.f32 %v681, %v828
    %v907 = vmax.f32 %v682, %v833
    %v908 = vmax.f32 %v683, %v838
    %v909 = vmax.f32 %v684, %v843
    %v910 = vmax.f32 %v685, %v848
    %v911 = vmax.f32 %v686, %v853
    %v912 = vmax.f32 %v687, %v858
    %v913 = vmax.f32 %v688, %v863
    %v914 = vmax.f32 %v689, %v868
    %v915 = vmax.f32 %v690, %v873
    %v916 = vmax.f32 %v691, %v878
    %v917 = vmax.f32 %v692, %v883
    %v918 = vmax.f32 %v693, %v888
    %v919 = vmax.f32 %v694, %v893
    %v920 = vmax.f32 %v695, %v898
    %v921 = vmax.f32 %v696, %v903
    %v922 = vld [vmem:[%s5] sm:$0x1]
    %v924 = vlaneseq
    %v925 = vshrl.u32 %v924, 7
    %v926 = vsub.s32 0, %v925
    %v927 = vrot.slane %v922, %v926
    %v929 = vadd.f32 %v906, %v927
    %v930 = vadd.f32 %v907, %v927
    %v931 = vadd.f32 %v908, %v927
    %v932 = vadd.f32 %v909, %v927
    %v933 = vadd.f32 %v910, %v927
    %v934 = vadd.f32 %v911, %v927
    %v935 = vadd.f32 %v912, %v927
    %v936 = vadd.f32 %v913, %v927
    %v937 = vadd.f32 %v914, %v927
    %v938 = vadd.f32 %v915, %v927
    %v939 = vadd.f32 %v916, %v927
    %v940 = vadd.f32 %v917, %v927
    %v941 = vadd.f32 %v918, %v927
    %v942 = vadd.f32 %v919, %v927
    %v943 = vadd.f32 %v920, %v927
    %v944 = vadd.f32 %v921, %v927
    %945 = vst [vmem:[#allocation2] sm:$0xff] %v929
    %946 = vst [vmem:[#allocation2 + $0x8] sm:$0xff] %v930
    %947 = vst [vmem:[#allocation2 + $0x10] sm:$0xff] %v931
    %948 = vst [vmem:[#allocation2 + $0x18] sm:$0xff] %v932
    %949 = vst [vmem:[#allocation2 + $0x20] sm:$0xff] %v933
    %950 = vst [vmem:[#allocation2 + $0x28] sm:$0xff] %v934
    %951 = vst [vmem:[#allocation2 + $0x30] sm:$0xff] %v935
    %952 = vst [vmem:[#allocation2 + $0x38] sm:$0xff] %v936
    %953 = vst [vmem:[#allocation2 + $0x40] sm:$0xff] %v937
    %954 = vst [vmem:[#allocation2 + $0x48] sm:$0xff] %v938
    %955 = vst [vmem:[#allocation2 + $0x50] sm:$0xff] %v939
    %956 = vst [vmem:[#allocation2 + $0x58] sm:$0xff] %v940
    %957 = vst [vmem:[#allocation2 + $0x60] sm:$0xff] %v941
    %958 = vst [vmem:[#allocation2 + $0x68] sm:$0xff] %v942
    %959 = vst [vmem:[#allocation2 + $0x70] sm:$0xff] %v943
    %960 = vst [vmem:[#allocation2 + $0x78] sm:$0xff] %v944
    %v961 = vadd.f32 %v929, %v930
    %v962 = vadd.f32 %v961, %v931
    %v963 = vadd.f32 %v962, %v932
    %v964 = vadd.f32 %v963, %v933
    %v965 = vadd.f32 %v964, %v934
    %v966 = vadd.f32 %v965, %v935
    %v967 = vadd.f32 %v966, %v936
    %v968 = vadd.f32 %v967, %v937
    %v969 = vadd.f32 %v968, %v938
    %v970 = vadd.f32 %v969, %v939
    %v971 = vadd.f32 %v970, %v940
    %v972 = vadd.f32 %v971, %v941
    %v973 = vadd.f32 %v972, %v942
    %v974 = vadd.f32 %v973, %v943
    %v975 = vadd.f32 %v974, %v944
    %v976 = vrot.slane %v975, 4
    %v977 = vadd.f32 %v975, %v976
    %v978 = vrot.slane %v977, 2
    %v979 = vadd.f32 %v977, %v978
    %v980 = vrot.slane %v979, 1
    %v981 = vadd.f32 %v979, %v980
    %982 = vst [vmem:[#allocation4] sm:$0x1] %v981
    %v983 = vmul.f32 %v929, %v929
    %v984 = vmul.f32 %v930, %v930
    %v985 = vmul.f32 %v931, %v931
    %v986 = vmul.f32 %v932, %v932
    %v987 = vmul.f32 %v933, %v933
    %v988 = vmul.f32 %v934, %v934
    %v989 = vmul.f32 %v935, %v935
    %v990 = vmul.f32 %v936, %v936
    %v991 = vmul.f32 %v937, %v937
    %v992 = vmul.f32 %v938, %v938
    %v993 = vmul.f32 %v939, %v939
    %v994 = vmul.f32 %v940, %v940
    %v995 = vmul.f32 %v941, %v941
    %v996 = vmul.f32 %v942, %v942
    %v997 = vmul.f32 %v943, %v943
    %v998 = vmul.f32 %v944, %v944
    %v999 = vadd.f32 %v983, %v984
    %v1000 = vadd.f32 %v999, %v985
    %v1001 = vadd.f32 %v1000, %v986
    %v1002 = vadd.f32 %v1001, %v987
    %v1003 = vadd.f32 %v1002, %v988
    %v1004 = vadd.f32 %v1003, %v989
    %v1005 = vadd.f32 %v1004, %v990
    %v1006 = vadd.f32 %v1005, %v991
    %v1007 = vadd.f32 %v1006, %v992
    %v1008 = vadd.f32 %v1007, %v993
    %v1009 = vadd.f32 %v1008, %v994
    %v1010 = vadd.f32 %v1009, %v995
    %v1011 = vadd.f32 %v1010, %v996
    %v1012 = vadd.f32 %v1011, %v997
    %v1013 = vadd.f32 %v1012, %v998
    %v1014 = vrot.slane %v1013, 4
    %v1015 = vadd.f32 %v1013, %v1014
    %v1016 = vrot.slane %v1015, 2
    %v1017 = vadd.f32 %v1015, %v1016
    %v1018 = vrot.slane %v1017, 1
    %v1019 = vadd.f32 %v1017, %v1018
    %1020 = vst [vmem:[#allocation6] sm:$0x1] %v1019
    // Predicated region
    $region26: #{tpu_custom_call.1} parent=1 // pred_check
      _
    $region27: #{tpu_custom_call.1} parent=1 // pred_check_branch
      %1022 = sbr.rel (0) target = $region29
    $region28: #{tpu_custom_call.1} parent=1 // pred_region
      %s1024 = ssub.s32 2048, 2048
      %1025 = vsyncadd [#allocation3], %s1024
      %s1026 = sshll.u32 [#allocation2], 4
      %s1027 = int_to_ptr.vmem [resolvable:$true] %s1026
      %1032 = dma.vmem_to_hbm [thread:$0]  %s1027, 2048, %s6, [#allocation3], 128, 128, 8
    $region29: #{tpu_custom_call.1} parent=1 // pred_fallthru
      _
    // Predicated region
    $region30: #{tpu_custom_call.1} parent=1 // pred_check
      _
    $region31: #{tpu_custom_call.1} parent=1 // pred_check_branch
      %1034 = sbr.rel (0) target = $region33
    $region32: #{tpu_custom_call.1} parent=1 // pred_region
      %s1036 = ssub.s32 16, 16
      %1037 = vsyncadd [#allocation5], %s1036
      %s1039 = sshll.u32 [#allocation4], 4
      %s1040 = int_to_ptr.vmem [resolvable:$true] %s1039
      %1042 = dma.vmem_to_hbm [thread:$0]  %s1040, 16, %s7, [#allocation5]
    $region33: #{tpu_custom_call.1} parent=1 // pred_fallthru
      _
    // Predicated region
    $region34: #{tpu_custom_call.1} parent=1 // pred_check
      _
    $region35: #{tpu_custom_call.1} parent=1 // pred_check_branch
      %1044 = sbr.rel (0) target = $region37
    $region36: #{tpu_custom_call.1} parent=1 // pred_region
      %s1046 = ssub.s32 16, 16
      %1047 = vsyncadd [#allocation5], %s1046
      %s1049 = sshll.u32 [#allocation6], 4
      %s1050 = int_to_ptr.vmem [resolvable:$true] %s1049
      %1052 = dma.vmem_to_hbm [thread:$0]  %s1050, 16, %s8, [#allocation5]
    $region37: #{tpu_custom_call.1} parent=1 // pred_fallthru
      _
    // Predicated region
    $region38: #{tpu_custom_call.1} parent=1 // pred_check
      _
    $region39: #{tpu_custom_call.1} parent=1 // pred_check_branch
      %1054 = sbr.rel (0) target = $region41
    $region40: #{tpu_custom_call.1} parent=1 // pred_region
      %1055 = dma.done [#allocation3], 2048
    $region41: #{tpu_custom_call.1} parent=1 // pred_fallthru
      _
    // Predicated region
    $region42: #{tpu_custom_call.1} parent=1 // pred_check
      _
    $region43: #{tpu_custom_call.1} parent=1 // pred_check_branch
      %1057 = sbr.rel (0) target = $region45
    $region44: #{tpu_custom_call.1} parent=1 // pred_region
      %1058 = dma.done [#allocation5], 16
    $region45: #{tpu_custom_call.1} parent=1 // pred_fallthru
      _
    // Predicated region
    $region46: #{tpu_custom_call.1} parent=1 // pred_check
      _
    $region47: #{tpu_custom_call.1} parent=1 // pred_check_branch
      %1060 = sbr.rel (0) target = $region49
    $region48: #{tpu_custom_call.1} parent=1 // pred_region
      %1061 = dma.done [#allocation5], 16
    $region49: #{tpu_custom_call.1} parent=1 // pred_fallthru
      _
    %1062 = vsyncpa [#allocation3], 1
    %1063 = vsyncpa [#allocation5], 1

</llo_original>
